<compile_context>
chip_gen: v7x
topology: tpu7x:2x2x1
jax: 0.10.0
libtpu: 0.0.40
codegen_flags: <defaults>
</compile_context>

<pallas_src>
import jax
import jax.numpy as jnp
from jax.experimental import pallas as pl
from jax.experimental.pallas import tpu as pltpu


_G = 8  # samples packed per VMEM row (sublane granule); G*Ds/G*Di/G*H1/G*H2 are lane widths


def _dnn_cat_fusion_kernel(seq_ref, img_ref, w1s_ref, w1i_ref, b1_ref,
                           w2_ref, b2_ref, o_ref):
    # Packed layout: each row holds G=8 consecutive samples; weights are
    # kron(I_G, W) block-diagonal expansions so packed matmuls never mix
    # samples.  All tiles are lane-dense; all dots are plain [M,K]@[K,N].
    h1 = jnp.dot(seq_ref[...], w1s_ref[...], preferred_element_type=jnp.float32)
    h1 = h1 + jnp.dot(img_ref[...], w1i_ref[...],
                      preferred_element_type=jnp.float32)
    h1 = jnp.maximum(h1 + b1_ref[...], 0.0)        # Linear -> ReLU   (layer 1)
    h1 = h1.astype(w2_ref.dtype)                   # shrink intermediate (bf16 path)
    h2 = jnp.dot(h1, w2_ref[...], preferred_element_type=jnp.float32)
    h2 = jnp.maximum(h2 + b2_ref[...], 0.0)        # Linear -> ReLU   (layer 2)
    # Norm == identity (dnn_norm_type=None); dropout is identity in eval mode.
    o_ref[...] = h2.astype(o_ref.dtype)


def dnn_cat_fusion(seq_features, img_features, params, *, block_b=32768,
                   input_dtype=jnp.bfloat16):
    """seq_features: [B, Ds], img_features: [B, Di]  ->  [B, H2].

    Inputs/outputs stay in their natural layouts; inside the kernel the batch
    is packed 8-samples-per-row so every tile is lane-dense.  `input_dtype`
    (default bf16) halves input HBM traffic; accumulation stays f32.
    """
    w1, b1, w2, b2 = params["w1"], params["b1"], params["w2"], params["b2"]
    B, Ds = seq_features.shape
    Bi, Di = img_features.shape
    assert B == Bi
    Din, H1 = w1.shape
    assert Din == Ds + Di
    H1b, H2 = w2.shape
    assert H1b == H1
    out_dtype = seq_features.dtype
    G = _G

    # --- pack the batch: G samples per row (free contiguous reshape). ---------
    Bp = ((B + G - 1) // G) * G
    if Bp != B:                      # only copies when B is not a multiple of 8
        pad = Bp - B
        seq_features = jnp.pad(seq_features, ((0, pad), (0, 0)))
        img_features = jnp.pad(img_features, ((0, pad), (0, 0)))
    R = Bp // G
    seq_p = seq_features.reshape(R, G * Ds)
    img_p = img_features.reshape(R, G * Di)

    # --- block-diagonal expanded weights (tiny; built once; VMEM resident). ---
    eye = jnp.eye(G, dtype=w1.dtype)
    w1s_big = jnp.kron(eye, w1[:Ds, :])          # [G*Ds, G*H1]
    w1i_big = jnp.kron(eye, w1[Ds:, :])          # [G*Di, G*H1]
    w2_big = jnp.kron(eye, w2)                   # [G*H1, G*H2]
    b1_big = jnp.tile(b1, G).reshape(1, G * H1).astype(jnp.float32)
    b2_big = jnp.tile(b2, G).reshape(1, G * H2).astype(jnp.float32)

    if input_dtype is not None:
        seq_p = seq_p.astype(input_dtype)
        img_p = img_p.astype(input_dtype)
        w1s_big = w1s_big.astype(input_dtype)
        w1i_big = w1i_big.astype(input_dtype)
        w2_big = w2_big.astype(input_dtype)

    # --- batch tiling: big tiles to amortize the ~0.35us per-step overhead. ---
    target_rows = max(1, block_b // G)
    if R > target_rows:
        block_rows = max(8, (target_rows // 8) * 8)
    elif R >= 1024:
        # Whole batch would fit one block; split in two so a 2-TC chip (v7x)
        # gets work on both cores via dimension_semantics=("parallel",).
        block_rows = (((R + 1) // 2) + 7) // 8 * 8
    else:
        block_rows = R               # full extent (legal even if not % 8)
    num_blocks = pl.cdiv(R, block_rows)

    flops = 2 * Bp * (Din * H1 + H1 * H2)
    bytes_accessed = (seq_p.size * seq_p.dtype.itemsize
                      + img_p.size * img_p.dtype.itemsize
                      + w1s_big.size * w1s_big.dtype.itemsize
                      + w1i_big.size * w1i_big.dtype.itemsize
                      + w2_big.size * w2_big.dtype.itemsize
                      + b1_big.size * 4 + b2_big.size * 4
                      + R * G * H2 * jnp.dtype(out_dtype).itemsize)

    out_p = pl.pallas_call(
        _dnn_cat_fusion_kernel,
        out_shape=jax.ShapeDtypeStruct((R, G * H2), out_dtype),
        grid_spec=pl.GridSpec(
            grid=(num_blocks,),
            in_specs=[
                pl.BlockSpec((block_rows, G * Ds), lambda i: (i, 0)),  # seq packed
                pl.BlockSpec((block_rows, G * Di), lambda i: (i, 0)),  # img packed
                pl.BlockSpec((G * Ds, G * H1), lambda i: (0, 0)),      # W1_seq big (resident)
                pl.BlockSpec((G * Di, G * H1), lambda i: (0, 0)),      # W1_img big (resident)
                pl.BlockSpec((1, G * H1), lambda i: (0, 0)),           # b1 big
                pl.BlockSpec((G * H1, G * H2), lambda i: (0, 0)),      # W2 big (resident)
                pl.BlockSpec((1, G * H2), lambda i: (0, 0)),           # b2 big
            ],
            out_specs=pl.BlockSpec((block_rows, G * H2), lambda i: (i, 0)),
        ),
        compiler_params=pltpu.CompilerParams(
            dimension_semantics=("parallel",),        # shard batch over TCs (v7x)
            vmem_limit_bytes=48 * 1024 * 1024,        # room for big tiles + f32 temps
        ),
        cost_estimate=pl.CostEstimate(
            flops=flops, transcendentals=0, bytes_accessed=bytes_accessed),
    )(seq_p, img_p, w1s_big, w1i_big, b1_big, w2_big, b2_big)

    out = out_p.reshape(Bp, H2)      # free contiguous reshape back to [Bp, H2]
    if Bp != B:
        out = out[:B]
    return out


def _reference(seq, img, params):
    x = jnp.concatenate([seq, img], axis=1)
    h = jnp.maximum(x @ params["w1"] + params["b1"], 0.0)
    h = jnp.maximum(h @ params["w2"] + params["b2"], 0.0)
    return h


if __name__ == "__main__":
    key = jax.random.PRNGKey(0)
    (k_seq, k_img, k_w1, k_b1, k_w2, k_b2,
     k_seq2, k_img2) = jax.random.split(key, 8)

    # Small shapes consistent with the module.
    B, Ds, Di = 8, 16, 16            # seq features + img features
    Din = Ds + Di                    # input_dim after concat
    H1, H2 = 32, 16                  # dnn_hidden_dims

    # Deterministic parameter init (Linear weights stored as [in, out]).
    params = {
        "w1": jax.random.normal(k_w1, (Din, H1), dtype=jnp.float32) * 0.1,
        "b1": jax.random.normal(k_b1, (H1,), dtype=jnp.float32) * 0.1,
        "w2": jax.random.normal(k_w2, (H1, H2), dtype=jnp.float32) * 0.1,
        "b2": jax.random.normal(k_b2, (H2,), dtype=jnp.float32) * 0.1,
    }

    # Test 1: pure f32 path, tight tolerance.
    seq = jax.random.normal(k_seq, (B, Ds), dtype=jnp.float32)
    img = jax.random.normal(k_img, (B, Di), dtype=jnp.float32)
    out = jax.block_until_ready(dnn_cat_fusion(seq, img, params,
                                               input_dtype=None))
    ref = _reference(seq, img, params)
    assert out.shape == (B, H2), out.shape
    assert jnp.allclose(out, ref, atol=1e-5, rtol=1e-5), "f32 mismatch vs ref"

    # Test 2: default bf16-input path with a batch that is NOT a multiple of 8
    # (exercises the pad / partial-tile handling).  Looser tolerance for bf16.
    B2 = 200
    seq2 = jax.random.normal(k_seq2, (B2, Ds), dtype=jnp.float32)
    img2 = jax.random.normal(k_img2, (B2, Di), dtype=jnp.float32)
    out2 = jax.block_until_ready(dnn_cat_fusion(seq2, img2, params))
    ref2 = _reference(seq2, img2, params)
    assert out2.shape == (B2, H2), out2.shape
    assert jnp.allclose(out2, ref2, atol=3e-2, rtol=3e-2), "bf16 mismatch vs ref"

    print("KERNEL_OK")
</pallas_src>

<mosaic_0001>
module attributes {stable_mosaic.version = 11 : i64} {
  func.func @_dnn_cat_fusion_kernel(%arg0: i32, %arg1: memref<1x128xf32, #tpu.memory_space<vmem>>, %arg2: memref<1x128xf32, #tpu.memory_space<vmem>>, %arg3: memref<128x256xf32, #tpu.memory_space<vmem>>, %arg4: memref<128x256xf32, #tpu.memory_space<vmem>>, %arg5: memref<1x256xf32, #tpu.memory_space<vmem>>, %arg6: memref<256x128xf32, #tpu.memory_space<vmem>>, %arg7: memref<1x128xf32, #tpu.memory_space<vmem>>, %arg8: memref<1x128xf32, #tpu.memory_space<vmem>>) attributes {dimension_semantics = [#tpu.dimension_semantics<parallel>], iteration_bounds = array<i64: 1>, scalar_prefetch = 0 : i64, scratch_operands = 0 : i64, tpu.core_type = #tpu.core_type<tc>, window_params = [{transform_indices = @transform_0, window_bounds = array<i64: 1, 128>}, {transform_indices = @transform_1, window_bounds = array<i64: 1, 128>}, {pipeline_mode = #tpu.pipeline_mode<synchronous>, transform_indices = @transform_2, window_bounds = array<i64: 128, 256>}, {pipeline_mode = #tpu.pipeline_mode<synchronous>, transform_indices = @transform_3, window_bounds = array<i64: 128, 256>}, {pipeline_mode = #tpu.pipeline_mode<synchronous>, transform_indices = @transform_4, window_bounds = array<i64: 1, 256>}, {pipeline_mode = #tpu.pipeline_mode<synchronous>, transform_indices = @transform_5, window_bounds = array<i64: 256, 128>}, {pipeline_mode = #tpu.pipeline_mode<synchronous>, transform_indices = @transform_6, window_bounds = array<i64: 1, 128>}, {transform_indices = @transform_7, window_bounds = array<i64: 1, 128>}]} {
    %c0 = arith.constant 0 : index
    %c0_0 = arith.constant 0 : index
    %0 = vector.load %arg1[%c0, %c0_0] : memref<1x128xf32, #tpu.memory_space<vmem>>, vector<1x128xf32>
    %c0_1 = arith.constant 0 : index
    %c0_2 = arith.constant 0 : index
    %1 = vector.load %arg3[%c0_1, %c0_2] : memref<128x256xf32, #tpu.memory_space<vmem>>, vector<128x256xf32>
    %cst = arith.constant dense<0.000000e+00> : vector<1x256xf32>
    %2 = tpu.matmul %0, %1, %cst {dimension_numbers = #tpu.dot_dimension_numbers<[1], [0], [0], [1], [0, 0, 1, 1], [], []>} : vector<1x128xf32>, vector<128x256xf32>, vector<1x256xf32> -> vector<1x256xf32>
    %c0_3 = arith.constant 0 : index
    %c0_4 = arith.constant 0 : index
    %3 = vector.load %arg2[%c0_3, %c0_4] : memref<1x128xf32, #tpu.memory_space<vmem>>, vector<1x128xf32>
    %c0_5 = arith.constant 0 : index
    %c0_6 = arith.constant 0 : index
    %4 = vector.load %arg4[%c0_5, %c0_6] : memref<128x256xf32, #tpu.memory_space<vmem>>, vector<128x256xf32>
    %cst_7 = arith.constant dense<0.000000e+00> : vector<1x256xf32>
    %5 = tpu.matmul %3, %4, %cst_7 {dimension_numbers = #tpu.dot_dimension_numbers<[1], [0], [0], [1], [0, 0, 1, 1], [], []>} : vector<1x128xf32>, vector<128x256xf32>, vector<1x256xf32> -> vector<1x256xf32>
    %6 = arith.addf %2, %5 : vector<1x256xf32>
    %c0_8 = arith.constant 0 : index
    %c0_9 = arith.constant 0 : index
    %7 = vector.load %arg5[%c0_8, %c0_9] : memref<1x256xf32, #tpu.memory_space<vmem>>, vector<1x256xf32>
    %8 = arith.addf %6, %7 : vector<1x256xf32>
    %cst_10 = arith.constant 0.000000e+00 : f32
    %9 = vector.broadcast %cst_10 : f32 to vector<1x256xf32>
    %10 = arith.maximumf %8, %9 : vector<1x256xf32>
    %c0_11 = arith.constant 0 : index
    %c0_12 = arith.constant 0 : index
    %11 = vector.load %arg6[%c0_11, %c0_12] : memref<256x128xf32, #tpu.memory_space<vmem>>, vector<256x128xf32>
    %cst_13 = arith.constant dense<0.000000e+00> : vector<1x128xf32>
    %12 = tpu.matmul %10, %11, %cst_13 {dimension_numbers = #tpu.dot_dimension_numbers<[1], [0], [0], [1], [0, 0, 1, 1], [], []>} : vector<1x256xf32>, vector<256x128xf32>, vector<1x128xf32> -> vector<1x128xf32>
    %c0_14 = arith.constant 0 : index
    %c0_15 = arith.constant 0 : index
    %13 = vector.load %arg7[%c0_14, %c0_15] : memref<1x128xf32, #tpu.memory_space<vmem>>, vector<1x128xf32>
    %14 = arith.addf %12, %13 : vector<1x128xf32>
    %cst_16 = arith.constant 0.000000e+00 : f32
    %15 = vector.broadcast %cst_16 : f32 to vector<1x128xf32>
    %16 = arith.maximumf %14, %15 : vector<1x128xf32>
    %c0_17 = arith.constant 0 : index
    %c0_18 = arith.constant 0 : index
    %17 = vector.load %arg8[%c0_17, %c0_18] : memref<1x128xf32, #tpu.memory_space<vmem>>, vector<1x128xf32>
    tpu.vector_store %arg8[%c0_17, %c0_18], %16 {strides = array<i32>} : memref<1x128xf32, #tpu.memory_space<vmem>>, vector<1x128xf32>,
    return
  }
  func.func @transform_0(%arg0: i32) -> (i32, i32) {
    %c0_i32 = arith.constant 0 : i32
    %c0_i32_0 = arith.constant 0 : i32
    return %arg0, %c0_i32 : i32, i32
  }
  func.func @transform_1(%arg0: i32) -> (i32, i32) {
    %c0_i32 = arith.constant 0 : i32
    %c0_i32_0 = arith.constant 0 : i32
    return %arg0, %c0_i32 : i32, i32
  }
  func.func @transform_2(%arg0: i32) -> (i32, i32) {
    %c0_i32 = arith.constant 0 : i32
    %c0_i32_0 = arith.constant 0 : i32
    %c0_i32_1 = arith.constant 0 : i32
    return %c0_i32, %c0_i32_0 : i32, i32
  }
  func.func @transform_3(%arg0: i32) -> (i32, i32) {
    %c0_i32 = arith.constant 0 : i32
    %c0_i32_0 = arith.constant 0 : i32
    %c0_i32_1 = arith.constant 0 : i32
    return %c0_i32, %c0_i32_0 : i32, i32
  }
  func.func @transform_4(%arg0: i32) -> (i32, i32) {
    %c0_i32 = arith.constant 0 : i32
    %c0_i32_0 = arith.constant 0 : i32
    %c0_i32_1 = arith.constant 0 : i32
    return %c0_i32, %c0_i32_0 : i32, i32
  }
  func.func @transform_5(%arg0: i32) -> (i32, i32) {
    %c0_i32 = arith.constant 0 : i32
    %c0_i32_0 = arith.constant 0 : i32
    %c0_i32_1 = arith.constant 0 : i32
    return %c0_i32, %c0_i32_0 : i32, i32
  }
  func.func @transform_6(%arg0: i32) -> (i32, i32) {
    %c0_i32 = arith.constant 0 : i32
    %c0_i32_0 = arith.constant 0 : i32
    %c0_i32_1 = arith.constant 0 : i32
    return %c0_i32, %c0_i32_0 : i32, i32
  }
  func.func @transform_7(%arg0: i32) -> (i32, i32) {
    %c0_i32 = arith.constant 0 : i32
    %c0_i32_0 = arith.constant 0 : i32
    return %arg0, %c0_i32 : i32, i32
  }
}

</mosaic_0001>

<llo_original>
// kernel: tpu_custom_call.1
$region0: #{tpu_custom_call.1}
  #allocation0 [shape = 'u32[]', space=smem, size = 0x4, offset = 0x4, fixed_abs, tag = 'smem constant byte address 0x4 - core index']
  #allocation1 [shape = 'u32[144,128]{1,0:T(1,128)}', space=vmem, size = 0x12000, scoped, tag = 'internal scratch']
  %s0 = inlined_call_operand.hbm [shape: f32[1,128], index: 0, kind: input, shape index: {}]
  %s1 = inlined_call_operand.vmem [shape: f32[1,128], index: 1, kind: input, shape index: {}]
  %s2 = inlined_call_operand.hbm [shape: f32[128,256], index: 2, kind: input, shape index: {}]
  %s3 = inlined_call_operand.hbm [shape: f32[128,256], index: 3, kind: input, shape index: {}]
  %s4 = inlined_call_operand.vmem [shape: f32[1,256], index: 4, kind: input, shape index: {}]
  %s5 = inlined_call_operand.hbm [shape: f32[256,128], index: 5, kind: input, shape index: {}]
  %s6 = inlined_call_operand.vmem [shape: f32[1,128], index: 6, kind: input, shape index: {}]
  %s7 = inlined_call_operand.hbm [shape: f32[1,128], index: 7, kind: output, shape index: {}]
  %s8 = sld [smem:[#allocation0]]
  $region54: #{tpu_custom_call.1} parent=0
    _
  %s10 = ssub.s32 1, %s8
  %s11 = scalar_select 0, %s10, %s8
  $region1: #{tpu_custom_call.1} parent=0
    #allocation2 [shape = 'u8[512]{0}', space=vmem, size = 0x400, scoped, tag = 'input window, operand 0, single buffered']
    #allocation3 [shape = 's32[1]{0}', space=sflag, size = 0x4, scoped, tag = 'scoped memory for tpu_custom_call.1']
    #allocation4 [shape = 's32[1]{0}', space=sflag, size = 0x4, scoped, tag = 'scoped memory for tpu_custom_call.1']
    #allocation5 [shape = 'u8[131072]{0}', space=vmem, size = 0x20000, scoped, tag = 'input window, operand 2, single buffered']
    #allocation6 [shape = 's32[1]{0}', space=sflag, size = 0x4, scoped, tag = 'scoped memory for tpu_custom_call.1']
    #allocation7 [shape = 'u8[131072]{0}', space=vmem, size = 0x20000, scoped, tag = 'input window, operand 3, single buffered']
    #allocation8 [shape = 'u8[131072]{0}', space=vmem, size = 0x20000, scoped, tag = 'input window, operand 5, single buffered']
    #allocation9 [shape = 's32[1]{0}', space=sflag, size = 0x4, scoped, tag = 'scoped memory for tpu_custom_call.1']
    #allocation10 [shape = 'u8[512]{0}', space=vmem, size = 0x400, scoped, tag = 'output window, operand 0, single buffered']
    %12 = vsyncpa [#allocation3], 0
    %13 = vsyncpa [#allocation6], 0
    %14 = vsyncpa [#allocation9], 0
    %15 = vsyncpa [#allocation4], 0
    // Predicated region
    $region2: #{tpu_custom_call.1} parent=1 // pred_check
      _
    $region3: #{tpu_custom_call.1} parent=1 // pred_check_branch
      %17 = sbr.rel (0) target = $region5
    $region4: #{tpu_custom_call.1} parent=1 // pred_region
      %s19 = ssub.s32 16, 16
      %20 = vsyncadd [#allocation3], %s19
      %s22 = sshll.u32 [#allocation2], 4
      %s23 = int_to_ptr.vmem [resolvable:$true] %s22
      %25 = dma.hbm_to_vmem [thread:$0]  %s0, 16, %s23, [#allocation3]
    $region5: #{tpu_custom_call.1} parent=1 // pred_fallthru
      _
    // Predicated region
    $region6: #{tpu_custom_call.1} parent=1 // pred_check
      _
    $region7: #{tpu_custom_call.1} parent=1 // pred_check_branch
      %27 = sbr.rel (0) target = $region9
    $region8: #{tpu_custom_call.1} parent=1 // pred_region
      _
    $region9: #{tpu_custom_call.1} parent=1 // pred_fallthru
      _
    // Predicated region
    $region10: #{tpu_custom_call.1} parent=1 // pred_check
      _
    $region11: #{tpu_custom_call.1} parent=1 // pred_check_branch
      %29 = sbr.rel (0) target = $region13
    $region12: #{tpu_custom_call.1} parent=1 // pred_region
      %s31 = ssub.s32 4096, 4096
      %32 = vsyncadd [#allocation6], %s31
      %s33 = sshll.u32 [#allocation5], 4
      %s34 = int_to_ptr.vmem [resolvable:$true] %s33
      %39 = dma.hbm_to_vmem [thread:$0]  %s2, 4096, %s34, [#allocation6], 256, 256, 16
    $region13: #{tpu_custom_call.1} parent=1 // pred_fallthru
      _
    // Predicated region
    $region14: #{tpu_custom_call.1} parent=1 // pred_check
      _
    $region15: #{tpu_custom_call.1} parent=1 // pred_check_branch
      %41 = sbr.rel (0) target = $region17
    $region16: #{tpu_custom_call.1} parent=1 // pred_region
      %s43 = ssub.s32 4096, 4096
      %44 = vsyncadd [#allocation6], %s43
      %s45 = sshll.u32 [#allocation7], 4
      %s46 = int_to_ptr.vmem [resolvable:$true] %s45
      %51 = dma.hbm_to_vmem [thread:$0]  %s3, 4096, %s46, [#allocation6], 256, 256, 16
    $region17: #{tpu_custom_call.1} parent=1 // pred_fallthru
      _
    // Predicated region
    $region18: #{tpu_custom_call.1} parent=1 // pred_check
      _
    $region19: #{tpu_custom_call.1} parent=1 // pred_check_branch
      %53 = sbr.rel (0) target = $region21
    $region20: #{tpu_custom_call.1} parent=1 // pred_region
      _
    $region21: #{tpu_custom_call.1} parent=1 // pred_fallthru
      _
    // Predicated region
    $region22: #{tpu_custom_call.1} parent=1 // pred_check
      _
    $region23: #{tpu_custom_call.1} parent=1 // pred_check_branch
      %55 = sbr.rel (0) target = $region25
    $region24: #{tpu_custom_call.1} parent=1 // pred_region
      %s57 = ssub.s32 4096, 4096
      %58 = vsyncadd [#allocation9], %s57
      %s59 = sshll.u32 [#allocation8], 4
      %s60 = int_to_ptr.vmem [resolvable:$true] %s59
      %65 = dma.hbm_to_vmem [thread:$0]  %s5, 4096, %s60, [#allocation9], 128, 128, 8
    $region25: #{tpu_custom_call.1} parent=1 // pred_fallthru
      _
    // Predicated region
    $region26: #{tpu_custom_call.1} parent=1 // pred_check
      _
    $region27: #{tpu_custom_call.1} parent=1 // pred_check_branch
      %67 = sbr.rel (0) target = $region29
    $region28: #{tpu_custom_call.1} parent=1 // pred_region
      _
    $region29: #{tpu_custom_call.1} parent=1 // pred_fallthru
      _
    // Predicated region
    $region30: #{tpu_custom_call.1} parent=1 // pred_check
      _
    $region31: #{tpu_custom_call.1} parent=1 // pred_check_branch
      %69 = sbr.rel (0) target = $region33
    $region32: #{tpu_custom_call.1} parent=1 // pred_region
      %70 = dma.done [#allocation3], 16
    $region33: #{tpu_custom_call.1} parent=1 // pred_fallthru
      _
    // Predicated region
    $region34: #{tpu_custom_call.1} parent=1 // pred_check
      _
    $region35: #{tpu_custom_call.1} parent=1 // pred_check_branch
      %72 = sbr.rel (0) target = $region37
    $region36: #{tpu_custom_call.1} parent=1 // pred_region
      %73 = dma.done [#allocation6], 4096
    $region37: #{tpu_custom_call.1} parent=1 // pred_fallthru
      _
    // Predicated region
    $region38: #{tpu_custom_call.1} parent=1 // pred_check
      _
    $region39: #{tpu_custom_call.1} parent=1 // pred_check_branch
      %75 = sbr.rel (0) target = $region41
    $region40: #{tpu_custom_call.1} parent=1 // pred_region
      %76 = dma.done [#allocation6], 4096
    $region41: #{tpu_custom_call.1} parent=1 // pred_fallthru
      _
    // Predicated region
    $region42: #{tpu_custom_call.1} parent=1 // pred_check
      _
    $region43: #{tpu_custom_call.1} parent=1 // pred_check_branch
      %78 = sbr.rel (0) target = $region45
    $region44: #{tpu_custom_call.1} parent=1 // pred_region
      %79 = dma.done [#allocation9], 4096
    $region45: #{tpu_custom_call.1} parent=1 // pred_fallthru
      _
    %v80 = vld [vmem:[#allocation2] sm:$0x1]
    %v81 = vld [vmem:[#allocation5] sm:$0xff]
    %v82 = vld [vmem:[#allocation5 + $0x8] sm:$0xff]
    %v83 = vld [vmem:[#allocation5 + $0x10] sm:$0xff]
    %v84 = vld [vmem:[#allocation5 + $0x18] sm:$0xff]
    %v85 = vld [vmem:[#allocation5 + $0x20] sm:$0xff]
    %v86 = vld [vmem:[#allocation5 + $0x28] sm:$0xff]
    %v87 = vld [vmem:[#allocation5 + $0x30] sm:$0xff]
    %v88 = vld [vmem:[#allocation5 + $0x38] sm:$0xff]
    %v89 = vld [vmem:[#allocation5 + $0x40] sm:$0xff]
    %v90 = vld [vmem:[#allocation5 + $0x48] sm:$0xff]
    %v91 = vld [vmem:[#allocation5 + $0x50] sm:$0xff]
    %v92 = vld [vmem:[#allocation5 + $0x58] sm:$0xff]
    %v93 = vld [vmem:[#allocation5 + $0x60] sm:$0xff]
    %v94 = vld [vmem:[#allocation5 + $0x68] sm:$0xff]
    %v95 = vld [vmem:[#allocation5 + $0x70] sm:$0xff]
    %v96 = vld [vmem:[#allocation5 + $0x78] sm:$0xff]
    %v97 = vld [vmem:[#allocation5 + $0x80] sm:$0xff]
    %v98 = vld [vmem:[#allocation5 + $0x88] sm:$0xff]
    %v99 = vld [vmem:[#allocation5 + $0x90] sm:$0xff]
    %v100 = vld [vmem:[#allocation5 + $0x98] sm:$0xff]
    %v101 = vld [vmem:[#allocation5 + $0xa0] sm:$0xff]
    %v102 = vld [vmem:[#allocation5 + $0xa8] sm:$0xff]
    %v103 = vld [vmem:[#allocation5 + $0xb0] sm:$0xff]
    %v104 = vld [vmem:[#allocation5 + $0xb8] sm:$0xff]
    %v105 = vld [vmem:[#allocation5 + $0xc0] sm:$0xff]
    %v106 = vld [vmem:[#allocation5 + $0xc8] sm:$0xff]
    %v107 = vld [vmem:[#allocation5 + $0xd0] sm:$0xff]
    %v108 = vld [vmem:[#allocation5 + $0xd8] sm:$0xff]
    %v109 = vld [vmem:[#allocation5 + $0xe0] sm:$0xff]
    %v110 = vld [vmem:[#allocation5 + $0xe8] sm:$0xff]
    %v111 = vld [vmem:[#allocation5 + $0xf0] sm:$0xff]
    %v112 = vld [vmem:[#allocation5 + $0xf8] sm:$0xff]
    %v113 = vld [vmem:[%s1] sm:$0x1]
    %v114 = vld [vmem:[#allocation7] sm:$0xff]
    %v115 = vld [vmem:[#allocation7 + $0x8] sm:$0xff]
    %v116 = vld [vmem:[#allocation7 + $0x10] sm:$0xff]
    %v117 = vld [vmem:[#allocation7 + $0x18] sm:$0xff]
    %v118 = vld [vmem:[#allocation7 + $0x20] sm:$0xff]
    %v119 = vld [vmem:[#allocation7 + $0x28] sm:$0xff]
    %v120 = vld [vmem:[#allocation7 + $0x30] sm:$0xff]
    %v121 = vld [vmem:[#allocation7 + $0x38] sm:$0xff]
    %v122 = vld [vmem:[#allocation7 + $0x40] sm:$0xff]
    %v123 = vld [vmem:[#allocation7 + $0x48] sm:$0xff]
    %v124 = vld [vmem:[#allocation7 + $0x50] sm:$0xff]
    %v125 = vld [vmem:[#allocation7 + $0x58] sm:$0xff]
    %v126 = vld [vmem:[#allocation7 + $0x60] sm:$0xff]
    %v127 = vld [vmem:[#allocation7 + $0x68] sm:$0xff]
    %v128 = vld [vmem:[#allocation7 + $0x70] sm:$0xff]
    %v129 = vld [vmem:[#allocation7 + $0x78] sm:$0xff]
    %v130 = vld [vmem:[#allocation7 + $0x80] sm:$0xff]
    %v131 = vld [vmem:[#allocation7 + $0x88] sm:$0xff]
    %v132 = vld [vmem:[#allocation7 + $0x90] sm:$0xff]
    %v133 = vld [vmem:[#allocation7 + $0x98] sm:$0xff]
    %v134 = vld [vmem:[#allocation7 + $0xa0] sm:$0xff]
    %v135 = vld [vmem:[#allocation7 + $0xa8] sm:$0xff]
    %v136 = vld [vmem:[#allocation7 + $0xb0] sm:$0xff]
    %v137 = vld [vmem:[#allocation7 + $0xb8] sm:$0xff]
    %v138 = vld [vmem:[#allocation7 + $0xc0] sm:$0xff]
    %v139 = vld [vmem:[#allocation7 + $0xc8] sm:$0xff]
    %v140 = vld [vmem:[#allocation7 + $0xd0] sm:$0xff]
    %v141 = vld [vmem:[#allocation7 + $0xd8] sm:$0xff]
    %v142 = vld [vmem:[#allocation7 + $0xe0] sm:$0xff]
    %v143 = vld [vmem:[#allocation7 + $0xe8] sm:$0xff]
    %v144 = vld [vmem:[#allocation7 + $0xf0] sm:$0xff]
    %v145 = vld [vmem:[#allocation7 + $0xf8] sm:$0xff]
    %146 = vmatprep.subr.mxu0 %v115
    %147 = vmatpush1.msra.mxu0 %v114
    %148 = vmatprep.subr.mxu0 %v117
    %149 = vmatpush1.msra.mxu0 %v116
    %150 = vmatprep.subr.mxu0 %v119
    %151 = vmatpush1.msra.mxu0 %v118
    %152 = vmatprep.subr.mxu0 %v121
    %153 = vmatpush1.msra.mxu0 %v120
    %154 = vmatprep.subr.mxu0 %v123
    %155 = vmatpush1.msra.mxu0 %v122
    %156 = vmatprep.subr.mxu0 %v125
    %157 = vmatpush1.msra.mxu0 %v124
    %158 = vmatprep.subr.mxu0 %v127
    %159 = vmatpush1.msra.mxu0 %v126
    %160 = vmatprep.subr.mxu0 %v129
    %161 = vmatpush1.msra.mxu0 %v128
    %162 = vmatprep.subr.mxu0 %v131
    %163 = vmatpush1.msra.mxu0 %v130
    %164 = vmatprep.subr.mxu0 %v133
    %165 = vmatpush1.msra.mxu0 %v132
    %166 = vmatprep.subr.mxu0 %v135
    %167 = vmatpush1.msra.mxu0 %v134
    %168 = vmatprep.subr.mxu0 %v137
    %169 = vmatpush1.msra.mxu0 %v136
    %170 = vmatprep.subr.mxu0 %v139
    %171 = vmatpush1.msra.mxu0 %v138
    %172 = vmatprep.subr.mxu0 %v141
    %173 = vmatpush1.msra.mxu0 %v140
    %174 = vmatprep.subr.mxu0 %v143
    %175 = vmatpush1.msra.mxu0 %v142
    %176 = vmatprep.subr.mxu0 %v145
    %177 = vmatpush1.msra.mxu0 %v144
    %178 = vmatprep.subr.mxu0 0.0
    %179 = vmatpush1.msra.mxu0 0.0
    %180 = vmatprep.subr.mxu0 0.0
    %181 = vmatpush1.msra.mxu0 0.0
    %182 = vmatprep.subr.mxu0 0.0
    %183 = vmatpush1.msra.mxu0 0.0
    %184 = vmatprep.subr.mxu0 0.0
    %185 = vmatpush1.msra.mxu0 0.0
    %186 = vmatprep.subr.mxu0 0.0
    %187 = vmatpush1.msra.mxu0 0.0
    %188 = vmatprep.subr.mxu0 0.0
    %189 = vmatpush1.msra.mxu0 0.0
    %190 = vmatprep.subr.mxu0 0.0
    %191 = vmatpush1.msra.mxu0 0.0
    %192 = vmatprep.subr.mxu0 0.0
    %193 = vmatpush1.msra.mxu0 0.0
    %194 = vmatprep.subr.mxu0 0.0
    %195 = vmatpush1.msra.mxu0 0.0
    %196 = vmatprep.subr.mxu0 0.0
    %197 = vmatpush1.msra.mxu0 0.0
    %198 = vmatprep.subr.mxu0 0.0
    %199 = vmatpush1.msra.mxu0 0.0
    %200 = vmatprep.subr.mxu0 0.0
    %201 = vmatpush1.msra.mxu0 0.0
    %202 = vmatprep.subr.mxu0 0.0
    %203 = vmatpush1.msra.mxu0 0.0
    %204 = vmatprep.subr.mxu0 0.0
    %205 = vmatpush1.msra.mxu0 0.0
    %206 = vmatprep.subr.mxu0 0.0
    %207 = vmatpush1.msra.mxu0 0.0
    %208 = vmatprep.subr.mxu0 0.0
    %209 = vmatpush1.msra.mxu0 0.0
    %210 = vmatprep.mubr.f32.mxu0 0.0
    %211 = vmatmul.mubr.f32.gmra.mrb[0].mxu0 %v113
    %v212 = vpop.f32.mrb[0].mxu0
    %v213 = vadd.f32 0.0, %v212
    %v214 = vpop.f32.mrb[0].mxu0
    %v215 = vadd.f32 0.0, %v214
    %216 = vdwg.mxu0
    %217 = vmatprep.subr.mxu0 %v82
    %218 = vmatpush1.msra.mxu0 %v81
    %219 = vmatprep.subr.mxu0 %v84
    %220 = vmatpush1.msra.mxu0 %v83
    %221 = vmatprep.subr.mxu0 %v86
    %222 = vmatpush1.msra.mxu0 %v85
    %223 = vmatprep.subr.mxu0 %v88
    %224 = vmatpush1.msra.mxu0 %v87
    %225 = vmatprep.subr.mxu0 %v90
    %226 = vmatpush1.msra.mxu0 %v89
    %227 = vmatprep.subr.mxu0 %v92
    %228 = vmatpush1.msra.mxu0 %v91
    %229 = vmatprep.subr.mxu0 %v94
    %230 = vmatpush1.msra.mxu0 %v93
    %231 = vmatprep.subr.mxu0 %v96
    %232 = vmatpush1.msra.mxu0 %v95
    %233 = vmatprep.subr.mxu0 %v98
    %234 = vmatpush1.msra.mxu0 %v97
    %235 = vmatprep.subr.mxu0 %v100
    %236 = vmatpush1.msra.mxu0 %v99
    %237 = vmatprep.subr.mxu0 %v102
    %238 = vmatpush1.msra.mxu0 %v101
    %239 = vmatprep.subr.mxu0 %v104
    %240 = vmatpush1.msra.mxu0 %v103
    %241 = vmatprep.subr.mxu0 %v106
    %242 = vmatpush1.msra.mxu0 %v105
    %243 = vmatprep.subr.mxu0 %v108
    %244 = vmatpush1.msra.mxu0 %v107
    %245 = vmatprep.subr.mxu0 %v110
    %246 = vmatpush1.msra.mxu0 %v109
    %247 = vmatprep.subr.mxu0 %v112
    %248 = vmatpush1.msra.mxu0 %v111
    %249 = vmatprep.subr.mxu0 0.0
    %250 = vmatpush1.msra.mxu0 0.0
    %251 = vmatprep.subr.mxu0 0.0
    %252 = vmatpush1.msra.mxu0 0.0
    %253 = vmatprep.subr.mxu0 0.0
    %254 = vmatpush1.msra.mxu0 0.0
    %255 = vmatprep.subr.mxu0 0.0
    %256 = vmatpush1.msra.mxu0 0.0
    %257 = vmatprep.subr.mxu0 0.0
    %258 = vmatpush1.msra.mxu0 0.0
    %259 = vmatprep.subr.mxu0 0.0
    %260 = vmatpush1.msra.mxu0 0.0
    %261 = vmatprep.subr.mxu0 0.0
    %262 = vmatpush1.msra.mxu0 0.0
    %263 = vmatprep.subr.mxu0 0.0
    %264 = vmatpush1.msra.mxu0 0.0
    %265 = vmatprep.subr.mxu0 0.0
    %266 = vmatpush1.msra.mxu0 0.0
    %267 = vmatprep.subr.mxu0 0.0
    %268 = vmatpush1.msra.mxu0 0.0
    %269 = vmatprep.subr.mxu0 0.0
    %270 = vmatpush1.msra.mxu0 0.0
    %271 = vmatprep.subr.mxu0 0.0
    %272 = vmatpush1.msra.mxu0 0.0
    %273 = vmatprep.subr.mxu0 0.0
    %274 = vmatpush1.msra.mxu0 0.0
    %275 = vmatprep.subr.mxu0 0.0
    %276 = vmatpush1.msra.mxu0 0.0
    %277 = vmatprep.subr.mxu0 0.0
    %278 = vmatpush1.msra.mxu0 0.0
    %279 = vmatprep.subr.mxu0 0.0
    %280 = vmatpush1.msra.mxu0 0.0
    %281 = vmatprep.mubr.f32.mxu0 0.0
    %282 = vmatmul.mubr.f32.gmra.mrb[0].mxu0 %v80
    %v283 = vpop.f32.mrb[0].mxu0
    %v284 = vadd.f32 %v213, %v283
    %v285 = vpop.f32.mrb[0].mxu0
    %v286 = vadd.f32 %v215, %v285
    %287 = vdwg.mxu0
    %v288 = vld [vmem:[%s4] sm:$0x3]
    %v290 = vlaneseq
    %v291 = vshrl.u32 %v290, 7
    %v292 = vsub.s32 0, %v291
    %v293 = vrot.slane %v288, %v292
    %v294 = vlaneseq
    %v295 = vshrl.u32 %v294, 7
    %v296 = vsub.s32 1, %v295
    %v297 = vrot.slane %v288, %v296
    %v300 = vadd.f32 %v284, %v293
    %v301 = vadd.f32 %v286, %v297
    %v302 = vmax.f32 %v300, 0.0
    %v303 = vmax.f32 %v301, 0.0
    %v304 = vld [vmem:[#allocation8] sm:$0xff]
    %v305 = vld [vmem:[#allocation8 + $0x8] sm:$0xff]
    %v306 = vld [vmem:[#allocation8 + $0x10] sm:$0xff]
    %v307 = vld [vmem:[#allocation8 + $0x18] sm:$0xff]
    %v308 = vld [vmem:[#allocation8 + $0x20] sm:$0xff]
    %v309 = vld [vmem:[#allocation8 + $0x28] sm:$0xff]
    %v310 = vld [vmem:[#allocation8 + $0x30] sm:$0xff]
    %v311 = vld [vmem:[#allocation8 + $0x38] sm:$0xff]
    %v312 = vld [vmem:[#allocation8 + $0x40] sm:$0xff]
    %v313 = vld [vmem:[#allocation8 + $0x48] sm:$0xff]
    %v314 = vld [vmem:[#allocation8 + $0x50] sm:$0xff]
    %v315 = vld [vmem:[#allocation8 + $0x58] sm:$0xff]
    %v316 = vld [vmem:[#allocation8 + $0x60] sm:$0xff]
    %v317 = vld [vmem:[#allocation8 + $0x68] sm:$0xff]
    %v318 = vld [vmem:[#allocation8 + $0x70] sm:$0xff]
    %v319 = vld [vmem:[#allocation8 + $0x78] sm:$0xff]
    %v320 = vld [vmem:[#allocation8 + $0x80] sm:$0xff]
    %v321 = vld [vmem:[#allocation8 + $0x88] sm:$0xff]
    %v322 = vld [vmem:[#allocation8 + $0x90] sm:$0xff]
    %v323 = vld [vmem:[#allocation8 + $0x98] sm:$0xff]
    %v324 = vld [vmem:[#allocation8 + $0xa0] sm:$0xff]
    %v325 = vld [vmem:[#allocation8 + $0xa8] sm:$0xff]
    %v326 = vld [vmem:[#allocation8 + $0xb0] sm:$0xff]
    %v327 = vld [vmem:[#allocation8 + $0xb8] sm:$0xff]
    %v328 = vld [vmem:[#allocation8 + $0xc0] sm:$0xff]
    %v329 = vld [vmem:[#allocation8 + $0xc8] sm:$0xff]
    %v330 = vld [vmem:[#allocation8 + $0xd0] sm:$0xff]
    %v331 = vld [vmem:[#allocation8 + $0xd8] sm:$0xff]
    %v332 = vld [vmem:[#allocation8 + $0xe0] sm:$0xff]
    %v333 = vld [vmem:[#allocation8 + $0xe8] sm:$0xff]
    %v334 = vld [vmem:[#allocation8 + $0xf0] sm:$0xff]
    %v335 = vld [vmem:[#allocation8 + $0xf8] sm:$0xff]
    %v336 = vld [vmem:[%s6] sm:$0x1]
    %337 = vmatprep.subr.mxu0 0.0
    %338 = vmatpush1.msra.mxu0 %v304
    %339 = vmatprep.subr.mxu0 0.0
    %340 = vmatpush1.msra.mxu0 %v305
    %341 = vmatprep.subr.mxu0 0.0
    %342 = vmatpush1.msra.mxu0 %v306
    %343 = vmatprep.subr.mxu0 0.0
    %344 = vmatpush1.msra.mxu0 %v307
    %345 = vmatprep.subr.mxu0 0.0
    %346 = vmatpush1.msra.mxu0 %v308
    %347 = vmatprep.subr.mxu0 0.0
    %348 = vmatpush1.msra.mxu0 %v309
    %349 = vmatprep.subr.mxu0 0.0
    %350 = vmatpush1.msra.mxu0 %v310
    %351 = vmatprep.subr.mxu0 0.0
    %352 = vmatpush1.msra.mxu0 %v311
    %353 = vmatprep.subr.mxu0 0.0
    %354 = vmatpush1.msra.mxu0 %v312
    %355 = vmatprep.subr.mxu0 0.0
    %356 = vmatpush1.msra.mxu0 %v313
    %357 = vmatprep.subr.mxu0 0.0
    %358 = vmatpush1.msra.mxu0 %v314
    %359 = vmatprep.subr.mxu0 0.0
    %360 = vmatpush1.msra.mxu0 %v315
    %361 = vmatprep.subr.mxu0 0.0
    %362 = vmatpush1.msra.mxu0 %v316
    %363 = vmatprep.subr.mxu0 0.0
    %364 = vmatpush1.msra.mxu0 %v317
    %365 = vmatprep.subr.mxu0 0.0
    %366 = vmatpush1.msra.mxu0 %v318
    %367 = vmatprep.subr.mxu0 0.0
    %368 = vmatpush1.msra.mxu0 %v319
    %369 = vmatprep.subr.mxu0 0.0
    %370 = vmatpush1.msra.mxu0 %v320
    %371 = vmatprep.subr.mxu0 0.0
    %372 = vmatpush1.msra.mxu0 %v321
    %373 = vmatprep.subr.mxu0 0.0
    %374 = vmatpush1.msra.mxu0 %v322
    %375 = vmatprep.subr.mxu0 0.0
    %376 = vmatpush1.msra.mxu0 %v323
    %377 = vmatprep.subr.mxu0 0.0
    %378 = vmatpush1.msra.mxu0 %v324
    %379 = vmatprep.subr.mxu0 0.0
    %380 = vmatpush1.msra.mxu0 %v325
    %381 = vmatprep.subr.mxu0 0.0
    %382 = vmatpush1.msra.mxu0 %v326
    %383 = vmatprep.subr.mxu0 0.0
    %384 = vmatpush1.msra.mxu0 %v327
    %385 = vmatprep.subr.mxu0 0.0
    %386 = vmatpush1.msra.mxu0 %v328
    %387 = vmatprep.subr.mxu0 0.0
    %388 = vmatpush1.msra.mxu0 %v329
    %389 = vmatprep.subr.mxu0 0.0
    %390 = vmatpush1.msra.mxu0 %v330
    %391 = vmatprep.subr.mxu0 0.0
    %392 = vmatpush1.msra.mxu0 %v331
    %393 = vmatprep.subr.mxu0 0.0
    %394 = vmatpush1.msra.mxu0 %v332
    %395 = vmatprep.subr.mxu0 0.0
    %396 = vmatpush1.msra.mxu0 %v333
    %397 = vmatprep.subr.mxu0 0.0
    %398 = vmatpush1.msra.mxu0 %v334
    %399 = vmatprep.subr.mxu0 0.0
    %400 = vmatpush1.msra.mxu0 %v335
    %401 = vmatprep.mubr.f32.mxu0 %v303
    %402 = vmatmul.mubr.f32.gmra.mrb[0].mxu0 %v302
    %v403 = vpop.f32.mrb[0].mxu0
    %v404 = vadd.f32 %v336, %v403
    %v405 = vpop.f32.mrb[0].mxu0
    %406 = vdwg.mxu0
    %v407 = vmax.f32 %v404, 0.0
    %408 = vst [vmem:[#allocation10] sm:$0x1] %v407
    // Predicated region
    $region46: #{tpu_custom_call.1} parent=1 // pred_check
      _
    $region47: #{tpu_custom_call.1} parent=1 // pred_check_branch
      %410 = sbr.rel (0) target = $region49
    $region48: #{tpu_custom_call.1} parent=1 // pred_region
      %s412 = ssub.s32 16, 16
      %413 = vsyncadd [#allocation4], %s412
      %s415 = sshll.u32 [#allocation10], 4
      %s416 = int_to_ptr.vmem [resolvable:$true] %s415
      %418 = dma.vmem_to_hbm [thread:$0]  %s416, 16, %s7, [#allocation4]
    $region49: #{tpu_custom_call.1} parent=1 // pred_fallthru
      _
    // Predicated region
    $region50: #{tpu_custom_call.1} parent=1 // pred_check
      _
    $region51: #{tpu_custom_call.1} parent=1 // pred_check_branch
      %420 = sbr.rel (0) target = $region53
    $region52: #{tpu_custom_call.1} parent=1 // pred_region
      %421 = dma.done [#allocation4], 16
    $region53: #{tpu_custom_call.1} parent=1 // pred_fallthru
      _
    %422 = vsyncpa [#allocation3], 1
    %423 = vsyncpa [#allocation6], 1
    %424 = vsyncpa [#allocation9], 1
    %425 = vsyncpa [#allocation4], 1

</llo_original>
